<compile_context>
chip_gen: v7x
topology: tpu7x:2x2x1
jax: 0.10.0
libtpu: 0.0.40
codegen_flags: <defaults>
</compile_context>

<pallas_src>
import functools

import jax
import jax.numpy as jnp
from jax.experimental import pallas as pl
from jax.experimental.pallas import tpu as pltpu


def _round_up(a: int, b: int) -> int:
    return (a + b - 1) // b * b


def mlp_kernel(x_ref, w1_ref, b1_ref, w2_ref, b2_ref, w3_ref, b3_ref,
               o_ref, acc_ref):
    k = pl.program_id(1)

    # Init the fc1 accumulator at the start of the K loop.
    @pl.when(k == 0)
    def _():
        acc_ref[...] = jnp.zeros_like(acc_ref)

    # Partial fc1 contraction for this K tile (f32 accumulation on the MXU).
    acc_ref[...] += jnp.dot(x_ref[...], w1_ref[...],
                            preferred_element_type=jnp.float32)

    # Finalize: bias + ReLU, then fc2 + ReLU and fc3 (weights are resident).
    @pl.when(k == pl.num_programs(1) - 1)
    def _():
        h1 = jnp.maximum(acc_ref[...] + b1_ref[...], 0.0)
        h2 = jnp.dot(h1.astype(w2_ref.dtype), w2_ref[...],
                     preferred_element_type=jnp.float32)
        h2 = jnp.maximum(h2 + b2_ref[...], 0.0)
        h3 = jnp.dot(h2.astype(w3_ref.dtype), w3_ref[...],
                     preferred_element_type=jnp.float32)
        o_ref[...] = (h3 + b3_ref[...]).astype(o_ref.dtype)


@functools.partial(jax.jit, static_argnames=("matmul_dtype",))
def mlp_forward(x, params, *, matmul_dtype=jnp.bfloat16):
    """x: [B, ...] -> flattened to [B, input_size] (mirrors x.view(B, -1))."""
    w1, b1, w2, b2, w3, b3 = params
    B = x.shape[0]
    x2d = x.reshape(B, -1)
    in_size = x2d.shape[1]
    hid = w1.shape[1]
    out_size = w3.shape[1]
    out_dtype = jnp.float32

    # ---- tile / pad sizes ---------------------------------------------------
    TB = min(128, _round_up(B, 8))          # batch tile (>= f32 sublane min)
    B_pad = _round_up(B, TB)
    in_pad = _round_up(in_size, 128)
    TK = min(in_pad, 512)                   # fc1 contraction tile
    in_pad = _round_up(in_pad, TK)
    hid_pad = _round_up(hid, 128)           # lane-dense hidden
    out_pad = _round_up(out_size, 128)      # lane-dense output stores
    nb, nk = B_pad // TB, in_pad // TK

    pad2 = lambda a, r, c: jnp.pad(a, ((0, r - a.shape[0]), (0, c - a.shape[1])))

    # Matmul operands in matmul_dtype (bf16 by default); biases stay f32.
    xp = pad2(x2d, B_pad, in_pad).astype(matmul_dtype)
    w1p = pad2(w1, in_pad, hid_pad).astype(matmul_dtype)
    w2p = pad2(w2, hid_pad, hid_pad).astype(matmul_dtype)
    w3p = pad2(w3, hid_pad, out_pad).astype(matmul_dtype)
    b1p = pad2(b1, 1, hid_pad).astype(jnp.float32)
    b2p = pad2(b2, 1, hid_pad).astype(jnp.float32)
    b3p = pad2(b3, 1, out_pad).astype(jnp.float32)

    # ---- VMEM budget (safe for v7x's 64 MiB physical / 32 MiB scoped) -------
    it = jnp.dtype(matmul_dtype).itemsize
    vmem_est = (
        2 * (TB * TK + TK * hid_pad + hid_pad * hid_pad + hid_pad * out_pad) * it
        + 2 * (2 * hid_pad + out_pad) * 4      # biases (double-buffered, f32)
        + 2 * TB * out_pad * 4                  # output tile
        + TB * hid_pad * 4)                     # accumulator scratch
    vmem_limit = int(min(max(2 * vmem_est, 16 << 20), 100 << 20))

    cost = pl.CostEstimate(
        flops=2 * B_pad * (in_pad * hid_pad + hid_pad * hid_pad + hid_pad * out_pad),
        transcendentals=0,
        bytes_accessed=int(
            xp.size * it + (w1p.size + w2p.size + w3p.size) * it
            + (b1p.size + b2p.size + b3p.size) * 4 + B_pad * out_pad * 4),
    )

    out = pl.pallas_call(
        mlp_kernel,
        out_shape=jax.ShapeDtypeStruct((B_pad, out_pad), out_dtype),
        grid=(nb, nk),
        in_specs=[
            pl.BlockSpec((TB, TK), lambda i, k: (i, k)),          # x tile
            pl.BlockSpec((TK, hid_pad), lambda i, k: (k, 0)),     # w1 K-tile
            pl.BlockSpec((1, hid_pad), lambda i, k: (0, 0)),      # b1 (resident)
            pl.BlockSpec((hid_pad, hid_pad), lambda i, k: (0, 0)),  # w2 (resident)
            pl.BlockSpec((1, hid_pad), lambda i, k: (0, 0)),      # b2
            pl.BlockSpec((hid_pad, out_pad), lambda i, k: (0, 0)),  # w3 (resident)
            pl.BlockSpec((1, out_pad), lambda i, k: (0, 0)),      # b3
        ],
        out_specs=pl.BlockSpec((TB, out_pad), lambda i, k: (i, 0)),
        scratch_shapes=[pltpu.VMEM((TB, hid_pad), jnp.float32)],
        compiler_params=pltpu.CompilerParams(
            dimension_semantics=("parallel", "arbitrary"),
            vmem_limit_bytes=vmem_limit,
        ),
        cost_estimate=cost,
    )(xp, w1p, b1p, w2p, b2p, w3p, b3p)

    # Strip batch / lane padding.
    return out[:B, :out_size]


def init_params(key, input_size, hidden_size, output_size, dtype=jnp.float32):
    """Deterministic init mimicking nn.Linear (uniform in +/- 1/sqrt(fan_in)).
    Weights stored as [in, out] (i.e. PyTorch W.T) for row-major matmul."""
    ks = jax.random.split(key, 6)

    def linear(kw, kb, fan_in, fan_out):
        bound = 1.0 / jnp.sqrt(fan_in)
        w = jax.random.uniform(kw, (fan_in, fan_out), dtype, -bound, bound)
        b = jax.random.uniform(kb, (1, fan_out), dtype, -bound, bound)
        return w, b

    w1, b1 = linear(ks[0], ks[1], input_size, hidden_size)
    w2, b2 = linear(ks[2], ks[3], hidden_size, hidden_size)
    w3, b3 = linear(ks[4], ks[5], hidden_size, output_size)
    return (w1, b1, w2, b2, w3, b3)


if __name__ == "__main__":
    key = jax.random.PRNGKey(0)
    kx, kp = jax.random.split(key)

    B, C, H, W = 2, 4, 16, 16          # input_size = C*H*W = 1024
    input_size = C * H * W
    hidden_size = 32
    output_size = 16

    x = jax.random.normal(kx, (B, C, H, W), dtype=jnp.float32)
    params = init_params(kp, input_size, hidden_size, output_size)

    # Pure-JAX reference
    w1, b1, w2, b2, w3, b3 = params
    x2d = x.reshape(B, -1)
    ref = jnp.maximum(x2d @ w1 + b1, 0.0)
    ref = jnp.maximum(ref @ w2 + b2, 0.0)
    ref = ref @ w3 + b3

    # f32 matmul path: exact (within fp32) check.
    out_f32 = mlp_forward(x, params, matmul_dtype=jnp.float32)
    jax.block_until_ready(out_f32)
    assert out_f32.shape == (B, output_size)
    assert jnp.allclose(out_f32, ref, atol=1e-5, rtol=1e-5)

    # bf16 matmul path (default / fast on MXU): loose tolerance, f32 accumulate.
    out_bf16 = mlp_forward(x, params, matmul_dtype=jnp.bfloat16)
    jax.block_until_ready(out_bf16)
    assert out_bf16.shape == (B, output_size)
    assert jnp.allclose(out_bf16, ref, atol=1e-1, rtol=1e-1)

    print("KERNEL_OK")
</pallas_src>

<mosaic_0001>
module attributes {stable_mosaic.version = 11 : i64} {
  func.func @mlp_kernel(%arg0: i32, %arg1: i32, %arg2: memref<8x512xf32, #tpu.memory_space<vmem>>, %arg3: memref<512x128xf32, #tpu.memory_space<vmem>>, %arg4: memref<1x128xf32, #tpu.memory_space<vmem>>, %arg5: memref<128x128xf32, #tpu.memory_space<vmem>>, %arg6: memref<1x128xf32, #tpu.memory_space<vmem>>, %arg7: memref<128x128xf32, #tpu.memory_space<vmem>>, %arg8: memref<1x128xf32, #tpu.memory_space<vmem>>, %arg9: memref<8x128xf32, #tpu.memory_space<vmem>>, %arg10: memref<8x128xf32, #tpu.memory_space<vmem>>) attributes {dimension_semantics = [#tpu.dimension_semantics<parallel>, #tpu.dimension_semantics<arbitrary>], iteration_bounds = array<i64: 1, 2>, scalar_prefetch = 0 : i64, scratch_operands = 1 : i64, tpu.core_type = #tpu.core_type<tc>, window_params = [{transform_indices = @transform_0, window_bounds = array<i64: 8, 512>}, {transform_indices = @transform_1, window_bounds = array<i64: 512, 128>}, {pipeline_mode = #tpu.pipeline_mode<synchronous>, transform_indices = @transform_2, window_bounds = array<i64: 1, 128>}, {pipeline_mode = #tpu.pipeline_mode<synchronous>, transform_indices = @transform_3, window_bounds = array<i64: 128, 128>}, {pipeline_mode = #tpu.pipeline_mode<synchronous>, transform_indices = @transform_4, window_bounds = array<i64: 1, 128>}, {pipeline_mode = #tpu.pipeline_mode<synchronous>, transform_indices = @transform_5, window_bounds = array<i64: 128, 128>}, {pipeline_mode = #tpu.pipeline_mode<synchronous>, transform_indices = @transform_6, window_bounds = array<i64: 1, 128>}, {transform_indices = @transform_7, window_bounds = array<i64: 8, 128>}]} {
    %c0_i32 = arith.constant 0 : i32
    %0 = arith.cmpi eq, %arg1, %c0_i32 : i32
    %1 = arith.extui %0 : i1 to i32
    %c0_i32_0 = arith.constant 0 : i32
    %2 = arith.cmpi ne, %1, %c0_i32_0 : i32
    scf.if %2 {
      %cst_9 = arith.constant 0.000000e+00 : f32
      %12 = vector.broadcast %cst_9 : f32 to vector<8x128xf32>
      %c0_10 = arith.constant 0 : index
      %c0_11 = arith.constant 0 : index
      %13 = vector.load %arg10[%c0_10, %c0_11] : memref<8x128xf32, #tpu.memory_space<vmem>>, vector<8x128xf32>
      tpu.vector_store %arg10[%c0_10, %c0_11], %12 {strides = array<i32>} : memref<8x128xf32, #tpu.memory_space<vmem>>, vector<8x128xf32>,
    } else {
    }
    %c0 = arith.constant 0 : index
    %c0_1 = arith.constant 0 : index
    %3 = vector.load %arg10[%c0, %c0_1] : memref<8x128xf32, #tpu.memory_space<vmem>>, vector<8x128xf32>
    %c0_2 = arith.constant 0 : index
    %c0_3 = arith.constant 0 : index
    %4 = vector.load %arg2[%c0_2, %c0_3] : memref<8x512xf32, #tpu.memory_space<vmem>>, vector<8x512xf32>
    %c0_4 = arith.constant 0 : index
    %c0_5 = arith.constant 0 : index
    %5 = vector.load %arg3[%c0_4, %c0_5] : memref<512x128xf32, #tpu.memory_space<vmem>>, vector<512x128xf32>
    %cst = arith.constant dense<0.000000e+00> : vector<8x128xf32>
    %6 = tpu.matmul %4, %5, %cst {dimension_numbers = #tpu.dot_dimension_numbers<[1], [0], [0], [1], [0, 0, 1, 1], [], []>} : vector<8x512xf32>, vector<512x128xf32>, vector<8x128xf32> -> vector<8x128xf32>
    %7 = arith.addf %3, %6 : vector<8x128xf32>
    %c0_6 = arith.constant 0 : index
    %c0_7 = arith.constant 0 : index
    %8 = vector.load %arg10[%c0_6, %c0_7] : memref<8x128xf32, #tpu.memory_space<vmem>>, vector<8x128xf32>
    tpu.vector_store %arg10[%c0_6, %c0_7], %7 {strides = array<i32>} : memref<8x128xf32, #tpu.memory_space<vmem>>, vector<8x128xf32>,
    %c1_i32 = arith.constant 1 : i32
    %9 = arith.cmpi eq, %arg1, %c1_i32 : i32
    %10 = arith.extui %9 : i1 to i32
    %c0_i32_8 = arith.constant 0 : i32
    %11 = arith.cmpi ne, %10, %c0_i32_8 : i32
    scf.if %11 {
      %c0_9 = arith.constant 0 : index
      %c0_10 = arith.constant 0 : index
      %12 = vector.load %arg10[%c0_9, %c0_10] : memref<8x128xf32, #tpu.memory_space<vmem>>, vector<8x128xf32>
      %c0_11 = arith.constant 0 : index
      %c0_12 = arith.constant 0 : index
      %13 = vector.load %arg4[%c0_11, %c0_12] : memref<1x128xf32, #tpu.memory_space<vmem>>, vector<1x128xf32>
      %14 = vector.broadcast %13 : vector<1x128xf32> to vector<8x128xf32>
      %15 = arith.addf %12, %14 : vector<8x128xf32>
      %cst_13 = arith.constant 0.000000e+00 : f32
      %16 = vector.broadcast %cst_13 : f32 to vector<8x128xf32>
      %17 = arith.maximumf %15, %16 : vector<8x128xf32>
      %c0_14 = arith.constant 0 : index
      %c0_15 = arith.constant 0 : index
      %18 = vector.load %arg5[%c0_14, %c0_15] : memref<128x128xf32, #tpu.memory_space<vmem>>, vector<128x128xf32>
      %cst_16 = arith.constant dense<0.000000e+00> : vector<8x128xf32>
      %19 = tpu.matmul %17, %18, %cst_16 {dimension_numbers = #tpu.dot_dimension_numbers<[1], [0], [0], [1], [0, 0, 1, 1], [], []>} : vector<8x128xf32>, vector<128x128xf32>, vector<8x128xf32> -> vector<8x128xf32>
      %c0_17 = arith.constant 0 : index
      %c0_18 = arith.constant 0 : index
      %20 = vector.load %arg6[%c0_17, %c0_18] : memref<1x128xf32, #tpu.memory_space<vmem>>, vector<1x128xf32>
      %21 = vector.broadcast %20 : vector<1x128xf32> to vector<8x128xf32>
      %22 = arith.addf %19, %21 : vector<8x128xf32>
      %cst_19 = arith.constant 0.000000e+00 : f32
      %23 = vector.broadcast %cst_19 : f32 to vector<8x128xf32>
      %24 = arith.maximumf %22, %23 : vector<8x128xf32>
      %c0_20 = arith.constant 0 : index
      %c0_21 = arith.constant 0 : index
      %25 = vector.load %arg7[%c0_20, %c0_21] : memref<128x128xf32, #tpu.memory_space<vmem>>, vector<128x128xf32>
      %cst_22 = arith.constant dense<0.000000e+00> : vector<8x128xf32>
      %26 = tpu.matmul %24, %25, %cst_22 {dimension_numbers = #tpu.dot_dimension_numbers<[1], [0], [0], [1], [0, 0, 1, 1], [], []>} : vector<8x128xf32>, vector<128x128xf32>, vector<8x128xf32> -> vector<8x128xf32>
      %c0_23 = arith.constant 0 : index
      %c0_24 = arith.constant 0 : index
      %27 = vector.load %arg8[%c0_23, %c0_24] : memref<1x128xf32, #tpu.memory_space<vmem>>, vector<1x128xf32>
      %28 = vector.broadcast %27 : vector<1x128xf32> to vector<8x128xf32>
      %29 = arith.addf %26, %28 : vector<8x128xf32>
      %c0_25 = arith.constant 0 : index
      %c0_26 = arith.constant 0 : index
      %30 = vector.load %arg9[%c0_25, %c0_26] : memref<8x128xf32, #tpu.memory_space<vmem>>, vector<8x128xf32>
      tpu.vector_store %arg9[%c0_25, %c0_26], %29 {strides = array<i32>} : memref<8x128xf32, #tpu.memory_space<vmem>>, vector<8x128xf32>,
    } else {
    }
    return
  }
  func.func @transform_0(%arg0: i32, %arg1: i32) -> (i32, i32) {
    %c0_i32 = arith.constant 0 : i32
    return %arg0, %arg1 : i32, i32
  }
  func.func @transform_1(%arg0: i32, %arg1: i32) -> (i32, i32) {
    %c0_i32 = arith.constant 0 : i32
    %c0_i32_0 = arith.constant 0 : i32
    return %arg1, %c0_i32 : i32, i32
  }
  func.func @transform_2(%arg0: i32, %arg1: i32) -> (i32, i32) {
    %c0_i32 = arith.constant 0 : i32
    %c0_i32_0 = arith.constant 0 : i32
    %c0_i32_1 = arith.constant 0 : i32
    return %c0_i32, %c0_i32_0 : i32, i32
  }
  func.func @transform_3(%arg0: i32, %arg1: i32) -> (i32, i32) {
    %c0_i32 = arith.constant 0 : i32
    %c0_i32_0 = arith.constant 0 : i32
    %c0_i32_1 = arith.constant 0 : i32
    return %c0_i32, %c0_i32_0 : i32, i32
  }
  func.func @transform_4(%arg0: i32, %arg1: i32) -> (i32, i32) {
    %c0_i32 = arith.constant 0 : i32
    %c0_i32_0 = arith.constant 0 : i32
    %c0_i32_1 = arith.constant 0 : i32
    return %c0_i32, %c0_i32_0 : i32, i32
  }
  func.func @transform_5(%arg0: i32, %arg1: i32) -> (i32, i32) {
    %c0_i32 = arith.constant 0 : i32
    %c0_i32_0 = arith.constant 0 : i32
    %c0_i32_1 = arith.constant 0 : i32
    return %c0_i32, %c0_i32_0 : i32, i32
  }
  func.func @transform_6(%arg0: i32, %arg1: i32) -> (i32, i32) {
    %c0_i32 = arith.constant 0 : i32
    %c0_i32_0 = arith.constant 0 : i32
    %c0_i32_1 = arith.constant 0 : i32
    return %c0_i32, %c0_i32_0 : i32, i32
  }
  func.func @transform_7(%arg0: i32, %arg1: i32) -> (i32, i32) {
    %c0_i32 = arith.constant 0 : i32
    %c0_i32_0 = arith.constant 0 : i32
    return %arg0, %c0_i32 : i32, i32
  }
}

</mosaic_0001>

<llo_original>
// kernel: mlp_forward.1
$region0: #{mlp_forward.1}
  #allocation0 [shape = 'u32[]', space=smem, size = 0x4, offset = 0x4, fixed_abs, tag = 'smem constant byte address 0x4 - core index']
  #allocation1 [shape = 'u32[144,128]{1,0:T(1,128)}', space=vmem, size = 0x12000, scoped, tag = 'internal scratch']
  #allocation2 [shape = 'f32[8,128]{1,0:T(8,128)}', space=vmem, size = 0x1000, scoped, tag = 'scratch operand']
  %s0 = inlined_call_operand.vmem [shape: f32[8,1024], index: 0, kind: input, shape index: {}]
  %s1 = inlined_call_operand.vmem [shape: f32[1024,128], index: 1, kind: input, shape index: {}]
  %s2 = inlined_call_operand.vmem [shape: f32[1,128], index: 2, kind: input, shape index: {}]
  %s3 = inlined_call_operand.vmem [shape: f32[128,128], index: 3, kind: input, shape index: {}]
  %s4 = inlined_call_operand.vmem [shape: f32[1,128], index: 4, kind: input, shape index: {}]
  %s5 = inlined_call_operand.vmem [shape: f32[128,128], index: 5, kind: input, shape index: {}]
  %s6 = inlined_call_operand.vmem [shape: f32[1,128], index: 6, kind: input, shape index: {}]
  %s7 = inlined_call_operand.vmem [shape: f32[8,128], index: 7, kind: output, shape index: {}]
  %s8 = sld [smem:[#allocation0]]
  $region69: #{mlp_forward.1} parent=0
    _
  %s10 = ssub.s32 1, %s8
  %s11 = scalar_select 0, %s10, %s8
  loop: start=0, step=1, limit=4
  $region2: #{mlp_forward.1} parent=0 // loop_pre_header
    _
  $region3: #{mlp_forward.1} parent=0 // loop_header
    %s13 = sphi 0, %s17
    %p14 = scmp.ge.s32.totalorder %s13, 4
    %s20 = sphi 0, %s32
    %s21 = sphi 0, %s28
    %s22 = sphi 0, %s20
    %s23 = sphi 0, %s21
    %s24 = sphi 0, %s22
    %s25 = sphi 0, %s23
    %s37 = sphi 0, %s39
    %s40 = sphi 0, %s37
    %s41 = sphi 0, %s40
    %s57 = sphi 0, %s41
    %s63 = sphi 0, %s65
    %s66 = sphi 0, %s63
    %s67 = sphi 0, %s66
    %s83 = sphi 0, %s67
    %s87 = sphi 0, %s87
    %s89 = sphi 0, %s87
    %s90 = sphi 0, %s89
    %s104 = sphi 0, %s90
    %s108 = sphi 0, %s108
    %s110 = sphi 0, %s108
    %s111 = sphi 0, %s110
    %s125 = sphi 0, %s111
    %s129 = sphi 0, %s129
    %s131 = sphi 0, %s129
    %s132 = sphi 0, %s131
    %s146 = sphi 0, %s132
    %s150 = sphi 0, %s150
    %s152 = sphi 0, %s150
    %s153 = sphi 0, %s152
    %s167 = sphi 0, %s153
    %s171 = sphi 0, %s171
    %s173 = sphi 0, %s171
    %s174 = sphi 0, %s173
    %s188 = sphi 0, %s174
    %s194 = sphi 0, %s196
    %s197 = sphi 0, %s194
    %s198 = sphi 0, %s197
    %s214 = sphi 0, %s198
  $region4: #{mlp_forward.1} parent=0 // loop_header_branch
    %16 = sbr.rel (%p14) target = $region8
  $region5: #{mlp_forward.1} parent=0 // loop_body
    %s18 = ssub.s32 %s13, 1
    %s19 = ssub.s32 %s13, 2
    %s26 = sadd.s32 1, %s21
    %p27 = scmp.ge.s32.totalorder %s26, 2
    %s28 = scalar_select %p27, 0, %s26
    %s29 = sadd.s32 1, %s20
    %s30 = scalar_select %p27, %s29, %s20
    %p31 = scmp.ge.s32.totalorder %s30, 1
    %s32 = scalar_select %p31, 0, %s30
    %s33 = ssub.s32 %s20, %s32
    %s34 = ssub.s32 %s21, %s28
    %s35 = sor.u32 %s33, %s34
    %p36 = scmp.eq.s32.totalorder %s35, 0
    %s38 = sadd.s32 %s37, 1
    %s39 = scalar_select %p36, %s37, %s38
    %p42 = pneg %p36
    %p43 = scmp.eq.s32.totalorder %s13, 1
    %p44 = por %p42, %p43
    %p45 = scmp.ne.s32.totalorder %s37, %s40
    %p46 = scmp.eq.s32.totalorder %s13, 0
    %p47 = por %p45, %p46
    %p48 = scmp.ne.s32.totalorder %s37, %s40
    %p49 = scmp.eq.s32.totalorder %s18, 1
    %p50 = por %p48, %p49
    %p51 = scmp.ne.s32.totalorder %s40, %s41
    %p52 = scmp.eq.s32.totalorder %s18, 0
    %p53 = por %p51, %p52
    %p54 = scmp.ne.s32.totalorder %s40, %s41
    %p55 = scmp.eq.s32.totalorder %s19, 1
    %p56 = por %p54, %p55
    %p58 = scmp.ne.s32.totalorder %s41, %s57
    %p59 = scmp.eq.s32.totalorder %s19, 0
    %p60 = por %p58, %p59
    %s61 = ssub.s32 %s21, %s28
    %p62 = scmp.eq.s32.totalorder %s61, 0
    %s64 = sadd.s32 %s63, 1
    %s65 = scalar_select %p62, %s63, %s64
    %p68 = pneg %p62
    %p69 = scmp.eq.s32.totalorder %s13, 1
    %p70 = por %p68, %p69
    %p71 = scmp.ne.s32.totalorder %s63, %s66
    %p72 = scmp.eq.s32.totalorder %s13, 0
    %p73 = por %p71, %p72
    %p74 = scmp.ne.s32.totalorder %s63, %s66
    %p75 = scmp.eq.s32.totalorder %s18, 1
    %p76 = por %p74, %p75
    %p77 = scmp.ne.s32.totalorder %s66, %s67
    %p78 = scmp.eq.s32.totalorder %s18, 0
    %p79 = por %p77, %p78
    %p80 = scmp.ne.s32.totalorder %s66, %s67
    %p81 = scmp.eq.s32.totalorder %s19, 1
    %p82 = por %p80, %p81
    %p84 = scmp.ne.s32.totalorder %s67, %s83
    %p85 = scmp.eq.s32.totalorder %s19, 0
    %p86 = por %p84, %p85
    %s88 = sadd.s32 %s87, 1
    %p91 = scmp.eq.s32.totalorder %s13, 1
    %p92 = scmp.ne.s32.totalorder %s87, %s89
    %p93 = scmp.eq.s32.totalorder %s13, 0
    %p94 = por %p92, %p93
    %p95 = scmp.ne.s32.totalorder %s87, %s89
    %p96 = scmp.eq.s32.totalorder %s18, 1
    %p97 = por %p95, %p96
    %p98 = scmp.ne.s32.totalorder %s89, %s90
    %p99 = scmp.eq.s32.totalorder %s18, 0
    %p100 = por %p98, %p99
    %p101 = scmp.ne.s32.totalorder %s89, %s90
    %p102 = scmp.eq.s32.totalorder %s19, 1
    %p103 = por %p101, %p102
    %p105 = scmp.ne.s32.totalorder %s90, %s104
    %p106 = scmp.eq.s32.totalorder %s19, 0
    %p107 = por %p105, %p106
    %s109 = sadd.s32 %s108, 1
    %p112 = scmp.eq.s32.totalorder %s13, 1
    %p113 = scmp.ne.s32.totalorder %s108, %s110
    %p114 = scmp.eq.s32.totalorder %s13, 0
    %p115 = por %p113, %p114
    %p116 = scmp.ne.s32.totalorder %s108, %s110
    %p117 = scmp.eq.s32.totalorder %s18, 1
    %p118 = por %p116, %p117
    %p119 = scmp.ne.s32.totalorder %s110, %s111
    %p120 = scmp.eq.s32.totalorder %s18, 0
    %p121 = por %p119, %p120
    %p122 = scmp.ne.s32.totalorder %s110, %s111
    %p123 = scmp.eq.s32.totalorder %s19, 1
    %p124 = por %p122, %p123
    %p126 = scmp.ne.s32.totalorder %s111, %s125
    %p127 = scmp.eq.s32.totalorder %s19, 0
    %p128 = por %p126, %p127
    %s130 = sadd.s32 %s129, 1
    %p133 = scmp.eq.s32.totalorder %s13, 1
    %p134 = scmp.ne.s32.totalorder %s129, %s131
    %p135 = scmp.eq.s32.totalorder %s13, 0
    %p136 = por %p134, %p135
    %p137 = scmp.ne.s32.totalorder %s129, %s131
    %p138 = scmp.eq.s32.totalorder %s18, 1
    %p139 = por %p137, %p138
    %p140 = scmp.ne.s32.totalorder %s131, %s132
    %p141 = scmp.eq.s32.totalorder %s18, 0
    %p142 = por %p140, %p141
    %p143 = scmp.ne.s32.totalorder %s131, %s132
    %p144 = scmp.eq.s32.totalorder %s19, 1
    %p145 = por %p143, %p144
    %p147 = scmp.ne.s32.totalorder %s132, %s146
    %p148 = scmp.eq.s32.totalorder %s19, 0
    %p149 = por %p147, %p148
    %s151 = sadd.s32 %s150, 1
    %p154 = scmp.eq.s32.totalorder %s13, 1
    %p155 = scmp.ne.s32.totalorder %s150, %s152
    %p156 = scmp.eq.s32.totalorder %s13, 0
    %p157 = por %p155, %p156
    %p158 = scmp.ne.s32.totalorder %s150, %s152
    %p159 = scmp.eq.s32.totalorder %s18, 1
    %p160 = por %p158, %p159
    %p161 = scmp.ne.s32.totalorder %s152, %s153
    %p162 = scmp.eq.s32.totalorder %s18, 0
    %p163 = por %p161, %p162
    %p164 = scmp.ne.s32.totalorder %s152, %s153
    %p165 = scmp.eq.s32.totalorder %s19, 1
    %p166 = por %p164, %p165
    %p168 = scmp.ne.s32.totalorder %s153, %s167
    %p169 = scmp.eq.s32.totalorder %s19, 0
    %p170 = por %p168, %p169
    %s172 = sadd.s32 %s171, 1
    %p175 = scmp.eq.s32.totalorder %s13, 1
    %p176 = scmp.ne.s32.totalorder %s171, %s173
    %p177 = scmp.eq.s32.totalorder %s13, 0
    %p178 = por %p176, %p177
    %p179 = scmp.ne.s32.totalorder %s171, %s173
    %p180 = scmp.eq.s32.totalorder %s18, 1
    %p181 = por %p179, %p180
    %p182 = scmp.ne.s32.totalorder %s173, %s174
    %p183 = scmp.eq.s32.totalorder %s18, 0
    %p184 = por %p182, %p183
    %p185 = scmp.ne.s32.totalorder %s173, %s174
    %p186 = scmp.eq.s32.totalorder %s19, 1
    %p187 = por %p185, %p186
    %p189 = scmp.ne.s32.totalorder %s174, %s188
    %p190 = scmp.eq.s32.totalorder %s19, 0
    %p191 = por %p189, %p190
    %s192 = ssub.s32 %s20, %s32
    %p193 = scmp.eq.s32.totalorder %s192, 0
    %s195 = sadd.s32 %s194, 1
    %s196 = scalar_select %p193, %s194, %s195
    %p199 = pneg %p193
    %p200 = scmp.eq.s32.totalorder %s13, 1
    %p201 = por %p199, %p200
    %p202 = scmp.ne.s32.totalorder %s194, %s197
    %p203 = scmp.eq.s32.totalorder %s13, 0
    %p204 = por %p202, %p203
    %p205 = scmp.ne.s32.totalorder %s194, %s197
    %p206 = scmp.eq.s32.totalorder %s18, 1
    %p207 = por %p205, %p206
    %p208 = scmp.ne.s32.totalorder %s197, %s198
    %p209 = scmp.eq.s32.totalorder %s18, 0
    %p210 = por %p208, %p209
    %p211 = scmp.ne.s32.totalorder %s197, %s198
    %p212 = scmp.eq.s32.totalorder %s19, 1
    %p213 = por %p211, %p212
    %p215 = scmp.ne.s32.totalorder %s198, %s214
    %p216 = scmp.eq.s32.totalorder %s19, 0
    %p217 = por %p215, %p216
    %p218 = scmp.le.s32.totalorder 1, %s13
    %p219 = scmp.lt.s32.totalorder %s13, 3
    %p220 = pnand %p218, %p219
    %p221 = pneg %p220
    // Predicated region
    $region9: #{mlp_forward.1} parent=5 // pred_check
      _
    $region10: #{mlp_forward.1} parent=5 // pred_check_branch
      %223 = sbr.rel (%p220) target = $region12
    $region11: #{mlp_forward.1} parent=5 // pred_region
      %s224 = ssub.s32 %s13, 1
      // Predicated region
      $region13: #{mlp_forward.1} parent=11 // pred_check
        %p225 = pneg %p100
      $region14: #{mlp_forward.1} parent=11 // pred_check_branch
        %227 = sbr.rel (%p225) target = $region16
      $region15: #{mlp_forward.1} parent=11 // pred_region
        _
      $region16: #{mlp_forward.1} parent=11 // pred_fallthru
        _
      // Predicated region
      $region17: #{mlp_forward.1} parent=11 // pred_check
        %p228 = pneg %p121
      $region18: #{mlp_forward.1} parent=11 // pred_check_branch
        %230 = sbr.rel (%p228) target = $region20
      $region19: #{mlp_forward.1} parent=11 // pred_region
        _
      $region20: #{mlp_forward.1} parent=11 // pred_fallthru
        _
      // Predicated region
      $region21: #{mlp_forward.1} parent=11 // pred_check
        %p231 = pneg %p142
      $region22: #{mlp_forward.1} parent=11 // pred_check_branch
        %233 = sbr.rel (%p231) target = $region24
      $region23: #{mlp_forward.1} parent=11 // pred_region
        _
      $region24: #{mlp_forward.1} parent=11 // pred_fallthru
        _
      // Predicated region
      $region25: #{mlp_forward.1} parent=11 // pred_check
        %p234 = pneg %p163
      $region26: #{mlp_forward.1} parent=11 // pred_check_branch
        %236 = sbr.rel (%p234) target = $region28
      $region27: #{mlp_forward.1} parent=11 // pred_region
        _
      $region28: #{mlp_forward.1} parent=11 // pred_fallthru
        _
      // Predicated region
      $region29: #{mlp_forward.1} parent=11 // pred_check
        %p237 = pneg %p184
      $region30: #{mlp_forward.1} parent=11 // pred_check_branch
        %239 = sbr.rel (%p237) target = $region32
      $region31: #{mlp_forward.1} parent=11 // pred_region
        _
      $region32: #{mlp_forward.1} parent=11 // pred_fallthru
        _
    $region12: #{mlp_forward.1} parent=5 // pred_fallthru
      _
    %p240 = scmp.lt.s32.totalorder %s13, 2
    // Predicated region
    $region33: #{mlp_forward.1} parent=5 // pred_check
      %p241 = pneg %p240
    $region34: #{mlp_forward.1} parent=5 // pred_check_branch
      %243 = sbr.rel (%p241) target = $region36
    $region35: #{mlp_forward.1} parent=5 // pred_region
      // Predicated region
      $region37: #{mlp_forward.1} parent=35 // pred_check
        %p244 = pneg %p47
      $region38: #{mlp_forward.1} parent=35 // pred_check_branch
        %246 = sbr.rel (%p244) target = $region40
      $region39: #{mlp_forward.1} parent=35 // pred_region
        %s247 = smul.u32 4, %s21
        %p248 = scmp.lt.s32.totalorder %s20, 0
        %s249 = scalar_select %p248, %s20, 0
        %p250 = scmp.lt.s32.totalorder %s247, 7
        %s251 = scalar_select %p250, %s247, 7
        %s252 = smul.addr %s249, 8
        %s253 = sadd.s32 %s251, %s252
        %s254 = smul.addr %s253, 8
        %s255 = scalar_lea.vmem %s0, %s254
        %s256 = smul.u32 4, %s21
      $region40: #{mlp_forward.1} parent=35 // pred_fallthru
        _
      // Predicated region
      $region41: #{mlp_forward.1} parent=35 // pred_check
        %p257 = pneg %p73
      $region42: #{mlp_forward.1} parent=35 // pred_check_branch
        %259 = sbr.rel (%p257) target = $region44
      $region43: #{mlp_forward.1} parent=35 // pred_region
        %s260 = smul.u32 64, %s21
        %p261 = scmp.lt.s32.totalorder %s260, 127
        %s262 = scalar_select %p261, %s260, 127
        %s263 = smul.addr %s262, 8
        %s264 = scalar_lea.vmem %s1, %s263
        %s265 = smul.u32 64, %s21
      $region44: #{mlp_forward.1} parent=35 // pred_fallthru
        _
    $region36: #{mlp_forward.1} parent=5 // pred_fallthru
      _
    %p266 = scmp.le.s32.totalorder 1, %s13
    %p267 = scmp.lt.s32.totalorder %s13, 3
    %p268 = pnand %p266, %p267
    %p269 = pneg %p268
    // Predicated region
    $region45: #{mlp_forward.1} parent=5 // pred_check
      _
    $region46: #{mlp_forward.1} parent=5 // pred_check_branch
      %271 = sbr.rel (%p268) target = $region48
    $region47: #{mlp_forward.1} parent=5 // pred_region
      %s272 = ssub.s32 %s13, 1
      %s273 = smul.u32 4, %s23
      %p274 = scmp.lt.s32.totalorder %s22, 0
      %s275 = scalar_select %p274, %s22, 0
      %p276 = scmp.lt.s32.totalorder %s273, 7
      %s277 = scalar_select %p276, %s273, 7
      %s278 = smul.addr %s275, 8
      %s279 = sadd.s32 %s277, %s278
      %s280 = smul.addr %s279, 8
      %s281 = scalar_lea.vmem %s0, %s280
      %p282 = pneg %p53
      %p283 = pneg %p50
      %s284 = smul.u32 64, %s23
      %p285 = scmp.lt.s32.totalorder %s284, 127
      %s286 = scalar_select %p285, %s284, 127
      %s287 = smul.addr %s286, 8
      %s288 = scalar_lea.vmem %s1, %s287
      %p289 = pneg %p79
      %p290 = pneg %p76
      %p291 = pneg %p100
      %p292 = pneg %p97
      %p293 = pneg %p121
      %p294 = pneg %p118
      %p295 = pneg %p142
      %p296 = pneg %p139
      %p297 = pneg %p163
      %p298 = pneg %p160
      %p299 = pneg %p184
      %p300 = pneg %p181
      %p301 = pneg %p210
      %p302 = pneg %p207
      %p303 = scmp.lt.s32.totalorder %s22, 0
      %s304 = scalar_select %p303, %s22, 0
      %s305 = smul.addr %s304, 8
      %s306 = scalar_lea.vmem %s7, %s305
      %s307 = smul.u32 4, %s23
      %p308 = scmp.lt.s32.totalorder %s22, 0
      %s309 = scalar_select %p308, %s22, 0
      %p310 = scmp.lt.s32.totalorder %s307, 7
      %s311 = scalar_select %p310, %s307, 7
      %s312 = smul.addr %s309, 8
      %s313 = sadd.s32 %s311, %s312
      %s314 = smul.addr %s313, 8
      %s315 = scalar_lea.vmem %s0, %s314
      %s316 = smul.u32 4, %s23
      %s317 = smul.u32 64, %s23
      %p318 = scmp.lt.s32.totalorder %s317, 127
      %s319 = scalar_select %p318, %s317, 127
      %s320 = smul.addr %s319, 8
      %s321 = scalar_lea.vmem %s1, %s320
      %s322 = smul.u32 64, %s23
      %p323 = scmp.lt.s32.totalorder %s22, 0
      %s324 = scalar_select %p323, %s22, 0
      %s325 = smul.addr %s324, 8
      %s326 = scalar_lea.vmem %s7, %s325
      %p327 = scmp.eq.s32.totalorder %s23, 0
      // Predicated region
      $region49: #{mlp_forward.1} parent=47 // pred_check
        %p328 = pneg %p327
      $region50: #{mlp_forward.1} parent=47 // pred_check_branch
        %330 = sbr.rel (%p328) target = $region52
      $region51: #{mlp_forward.1} parent=47 // pred_region
        %331 = vst [vmem:[#allocation2] sm:$0xff] 0.0
      $region52: #{mlp_forward.1} parent=47 // pred_fallthru
        _
      %v332 = vld [vmem:[#allocation2] sm:$0xff]
      %v333 = vld [vmem:[%s315] sm:$0xff]
      %v334 = vld [vmem:[%s315 + $0x8] sm:$0xff]
      %v335 = vld [vmem:[%s315 + $0x10] sm:$0xff]
      %v336 = vld [vmem:[%s315 + $0x18] sm:$0xff]
      %v337 = vld [vmem:[%s321] sm:$0xff]
      %v338 = vld [vmem:[%s321 + $0x8] sm:$0xff]
      %v339 = vld [vmem:[%s321 + $0x10] sm:$0xff]
      %v340 = vld [vmem:[%s321 + $0x18] sm:$0xff]
      %v341 = vld [vmem:[%s321 + $0x20] sm:$0xff]
      %v342 = vld [vmem:[%s321 + $0x28] sm:$0xff]
      %v343 = vld [vmem:[%s321 + $0x30] sm:$0xff]
      %v344 = vld [vmem:[%s321 + $0x38] sm:$0xff]
      %v345 = vld [vmem:[%s321 + $0x40] sm:$0xff]
      %v346 = vld [vmem:[%s321 + $0x48] sm:$0xff]
      %v347 = vld [vmem:[%s321 + $0x50] sm:$0xff]
      %v348 = vld [vmem:[%s321 + $0x58] sm:$0xff]
      %v349 = vld [vmem:[%s321 + $0x60] sm:$0xff]
      %v350 = vld [vmem:[%s321 + $0x68] sm:$0xff]
      %v351 = vld [vmem:[%s321 + $0x70] sm:$0xff]
      %v352 = vld [vmem:[%s321 + $0x78] sm:$0xff]
      %v353 = vld [vmem:[%s321 + $0x80] sm:$0xff]
      %v354 = vld [vmem:[%s321 + $0x88] sm:$0xff]
      %v355 = vld [vmem:[%s321 + $0x90] sm:$0xff]
      %v356 = vld [vmem:[%s321 + $0x98] sm:$0xff]
      %v357 = vld [vmem:[%s321 + $0xa0] sm:$0xff]
      %v358 = vld [vmem:[%s321 + $0xa8] sm:$0xff]
      %v359 = vld [vmem:[%s321 + $0xb0] sm:$0xff]
      %v360 = vld [vmem:[%s321 + $0xb8] sm:$0xff]
      %v361 = vld [vmem:[%s321 + $0xc0] sm:$0xff]
      %v362 = vld [vmem:[%s321 + $0xc8] sm:$0xff]
      %v363 = vld [vmem:[%s321 + $0xd0] sm:$0xff]
      %v364 = vld [vmem:[%s321 + $0xd8] sm:$0xff]
      %v365 = vld [vmem:[%s321 + $0xe0] sm:$0xff]
      %v366 = vld [vmem:[%s321 + $0xe8] sm:$0xff]
      %v367 = vld [vmem:[%s321 + $0xf0] sm:$0xff]
      %v368 = vld [vmem:[%s321 + $0xf8] sm:$0xff]
      %v369 = vld [vmem:[%s321 + $0x100] sm:$0xff]
      %v370 = vld [vmem:[%s321 + $0x108] sm:$0xff]
      %v371 = vld [vmem:[%s321 + $0x110] sm:$0xff]
      %v372 = vld [vmem:[%s321 + $0x118] sm:$0xff]
      %v373 = vld [vmem:[%s321 + $0x120] sm:$0xff]
      %v374 = vld [vmem:[%s321 + $0x128] sm:$0xff]
      %v375 = vld [vmem:[%s321 + $0x130] sm:$0xff]
      %v376 = vld [vmem:[%s321 + $0x138] sm:$0xff]
      %v377 = vld [vmem:[%s321 + $0x140] sm:$0xff]
      %v378 = vld [vmem:[%s321 + $0x148] sm:$0xff]
      %v379 = vld [vmem:[%s321 + $0x150] sm:$0xff]
      %v380 = vld [vmem:[%s321 + $0x158] sm:$0xff]
      %v381 = vld [vmem:[%s321 + $0x160] sm:$0xff]
      %v382 = vld [vmem:[%s321 + $0x168] sm:$0xff]
      %v383 = vld [vmem:[%s321 + $0x170] sm:$0xff]
      %v384 = vld [vmem:[%s321 + $0x178] sm:$0xff]
      %v385 = vld [vmem:[%s321 + $0x180] sm:$0xff]
      %v386 = vld [vmem:[%s321 + $0x188] sm:$0xff]
      %v387 = vld [vmem:[%s321 + $0x190] sm:$0xff]
      %v388 = vld [vmem:[%s321 + $0x198] sm:$0xff]
      %v389 = vld [vmem:[%s321 + $0x1a0] sm:$0xff]
      %v390 = vld [vmem:[%s321 + $0x1a8] sm:$0xff]
      %v391 = vld [vmem:[%s321 + $0x1b0] sm:$0xff]
      %v392 = vld [vmem:[%s321 + $0x1b8] sm:$0xff]
      %v393 = vld [vmem:[%s321 + $0x1c0] sm:$0xff]
      %v394 = vld [vmem:[%s321 + $0x1c8] sm:$0xff]
      %v395 = vld [vmem:[%s321 + $0x1d0] sm:$0xff]
      %v396 = vld [vmem:[%s321 + $0x1d8] sm:$0xff]
      %v397 = vld [vmem:[%s321 + $0x1e0] sm:$0xff]
      %v398 = vld [vmem:[%s321 + $0x1e8] sm:$0xff]
      %v399 = vld [vmem:[%s321 + $0x1f0] sm:$0xff]
      %v400 = vld [vmem:[%s321 + $0x1f8] sm:$0xff]
      %401 = vmatprep.subr.mxu0 0.0
      %402 = vmatpush1.msra.mxu0 %v337
      %403 = vmatprep.subr.mxu0 0.0
      %404 = vmatpush1.msra.mxu0 %v338
      %405 = vmatprep.subr.mxu0 0.0
      %406 = vmatpush1.msra.mxu0 %v339
      %407 = vmatprep.subr.mxu0 0.0
      %408 = vmatpush1.msra.mxu0 %v340
      %409 = vmatprep.subr.mxu0 0.0
      %410 = vmatpush1.msra.mxu0 %v341
      %411 = vmatprep.subr.mxu0 0.0
      %412 = vmatpush1.msra.mxu0 %v342
      %413 = vmatprep.subr.mxu0 0.0
      %414 = vmatpush1.msra.mxu0 %v343
      %415 = vmatprep.subr.mxu0 0.0
      %416 = vmatpush1.msra.mxu0 %v344
      %417 = vmatprep.subr.mxu0 0.0
      %418 = vmatpush1.msra.mxu0 %v345
      %419 = vmatprep.subr.mxu0 0.0
      %420 = vmatpush1.msra.mxu0 %v346
      %421 = vmatprep.subr.mxu0 0.0
      %422 = vmatpush1.msra.mxu0 %v347
      %423 = vmatprep.subr.mxu0 0.0
      %424 = vmatpush1.msra.mxu0 %v348
      %425 = vmatprep.subr.mxu0 0.0
      %426 = vmatpush1.msra.mxu0 %v349
      %427 = vmatprep.subr.mxu0 0.0
      %428 = vmatpush1.msra.mxu0 %v350
      %429 = vmatprep.subr.mxu0 0.0
      %430 = vmatpush1.msra.mxu0 %v351
      %431 = vmatprep.subr.mxu0 0.0
      %432 = vmatpush1.msra.mxu0 %v352
      %433 = vmatprep.subr.mxu0 0.0
      %434 = vmatpush1.msra.mxu0 %v353
      %435 = vmatprep.subr.mxu0 0.0
      %436 = vmatpush1.msra.mxu0 %v354
      %437 = vmatprep.subr.mxu0 0.0
      %438 = vmatpush1.msra.mxu0 %v355
      %439 = vmatprep.subr.mxu0 0.0
      %440 = vmatpush1.msra.mxu0 %v356
      %441 = vmatprep.subr.mxu0 0.0
      %442 = vmatpush1.msra.mxu0 %v357
      %443 = vmatprep.subr.mxu0 0.0
      %444 = vmatpush1.msra.mxu0 %v358
      %445 = vmatprep.subr.mxu0 0.0
      %446 = vmatpush1.msra.mxu0 %v359
      %447 = vmatprep.subr.mxu0 0.0
      %448 = vmatpush1.msra.mxu0 %v360
      %449 = vmatprep.subr.mxu0 0.0
      %450 = vmatpush1.msra.mxu0 %v361
      %451 = vmatprep.subr.mxu0 0.0
      %452 = vmatpush1.msra.mxu0 %v362
      %453 = vmatprep.subr.mxu0 0.0
      %454 = vmatpush1.msra.mxu0 %v363
      %455 = vmatprep.subr.mxu0 0.0
      %456 = vmatpush1.msra.mxu0 %v364
      %457 = vmatprep.subr.mxu0 0.0
      %458 = vmatpush1.msra.mxu0 %v365
      %459 = vmatprep.subr.mxu0 0.0
      %460 = vmatpush1.msra.mxu0 %v366
      %461 = vmatprep.subr.mxu0 0.0
      %462 = vmatpush1.msra.mxu0 %v367
      %463 = vmatprep.subr.mxu0 0.0
      %464 = vmatpush1.msra.mxu0 %v368
      %465 = vmatprep.mubr.f32.mxu0 %v334
      %466 = vmatmul.mubr.f32.gmra.mrb[0].mxu0 %v333
      %v467 = vpop.f32.mrb[0].mxu0
      %v468 = vadd.f32 0.0, %v467
      %v469 = vpop.f32.mrb[0].mxu0
      %470 = vdwg.mxu0
      %471 = vmatprep.subr.mxu0 0.0
      %472 = vmatpush1.msra.mxu0 %v369
      %473 = vmatprep.subr.mxu0 0.0
      %474 = vmatpush1.msra.mxu0 %v370
      %475 = vmatprep.subr.mxu0 0.0
      %476 = vmatpush1.msra.mxu0 %v371
      %477 = vmatprep.subr.mxu0 0.0
      %478 = vmatpush1.msra.mxu0 %v372
      %479 = vmatprep.subr.mxu0 0.0
      %480 = vmatpush1.msra.mxu0 %v373
      %481 = vmatprep.subr.mxu0 0.0
      %482 = vmatpush1.msra.mxu0 %v374
      %483 = vmatprep.subr.mxu0 0.0
      %484 = vmatpush1.msra.mxu0 %v375
      %485 = vmatprep.subr.mxu0 0.0
      %486 = vmatpush1.msra.mxu0 %v376
      %487 = vmatprep.subr.mxu0 0.0
      %488 = vmatpush1.msra.mxu0 %v377
      %489 = vmatprep.subr.mxu0 0.0
      %490 = vmatpush1.msra.mxu0 %v378
      %491 = vmatprep.subr.mxu0 0.0
      %492 = vmatpush1.msra.mxu0 %v379
      %493 = vmatprep.subr.mxu0 0.0
      %494 = vmatpush1.msra.mxu0 %v380
      %495 = vmatprep.subr.mxu0 0.0
      %496 = vmatpush1.msra.mxu0 %v381
      %497 = vmatprep.subr.mxu0 0.0
      %498 = vmatpush1.msra.mxu0 %v382
      %499 = vmatprep.subr.mxu0 0.0
      %500 = vmatpush1.msra.mxu0 %v383
      %501 = vmatprep.subr.mxu0 0.0
      %502 = vmatpush1.msra.mxu0 %v384
      %503 = vmatprep.subr.mxu0 0.0
      %504 = vmatpush1.msra.mxu0 %v385
      %505 = vmatprep.subr.mxu0 0.0
      %506 = vmatpush1.msra.mxu0 %v386
      %507 = vmatprep.subr.mxu0 0.0
      %508 = vmatpush1.msra.mxu0 %v387
      %509 = vmatprep.subr.mxu0 0.0
      %510 = vmatpush1.msra.mxu0 %v388
      %511 = vmatprep.subr.mxu0 0.0
      %512 = vmatpush1.msra.mxu0 %v389
      %513 = vmatprep.subr.mxu0 0.0
      %514 = vmatpush1.msra.mxu0 %v390
      %515 = vmatprep.subr.mxu0 0.0
      %516 = vmatpush1.msra.mxu0 %v391
      %517 = vmatprep.subr.mxu0 0.0
      %518 = vmatpush1.msra.mxu0 %v392
      %519 = vmatprep.subr.mxu0 0.0
      %520 = vmatpush1.msra.mxu0 %v393
      %521 = vmatprep.subr.mxu0 0.0
      %522 = vmatpush1.msra.mxu0 %v394
      %523 = vmatprep.subr.mxu0 0.0
      %524 = vmatpush1.msra.mxu0 %v395
      %525 = vmatprep.subr.mxu0 0.0
      %526 = vmatpush1.msra.mxu0 %v396
      %527 = vmatprep.subr.mxu0 0.0
      %528 = vmatpush1.msra.mxu0 %v397
      %529 = vmatprep.subr.mxu0 0.0
      %530 = vmatpush1.msra.mxu0 %v398
      %531 = vmatprep.subr.mxu0 0.0
      %532 = vmatpush1.msra.mxu0 %v399
      %533 = vmatprep.subr.mxu0 0.0
      %534 = vmatpush1.msra.mxu0 %v400
      %535 = vmatprep.mubr.f32.mxu0 %v336
      %536 = vmatmul.mubr.f32.gmra.mrb[0].mxu0 %v335
      %v537 = vpop.f32.mrb[0].mxu0
      %v538 = vadd.f32 %v468, %v537
      %v539 = vpop.f32.mrb[0].mxu0
      %540 = vdwg.mxu0
      %v541 = vadd.f32 %v332, %v538
      %542 = vst [vmem:[#allocation2] sm:$0xff] %v541
      %p543 = scmp.eq.s32.totalorder %s23, 1
      // Predicated region
      $region53: #{mlp_forward.1} parent=47 // pred_check
        %p544 = pneg %p543
      $region54: #{mlp_forward.1} parent=47 // pred_check_branch
        %546 = sbr.rel (%p544) target = $region56
      $region55: #{mlp_forward.1} parent=47 // pred_region
        %v547 = vld [vmem:[#allocation2] sm:$0xff]
        %v548 = vld [vmem:[%s2] sm:$0x1]
        %v550 = vlaneseq
        %v551 = vshrl.u32 %v550, 7
        %v552 = vsub.s32 0, %v551
        %v553 = vrot.slane %v548, %v552
        %v555 = vadd.f32 %v547, %v553
        %v556 = vmax.f32 %v555, 0.0
        %v557 = vld [vmem:[%s3] sm:$0xff]
        %v558 = vld [vmem:[%s3 + $0x8] sm:$0xff]
        %v559 = vld [vmem:[%s3 + $0x10] sm:$0xff]
        %v560 = vld [vmem:[%s3 + $0x18] sm:$0xff]
        %v561 = vld [vmem:[%s3 + $0x20] sm:$0xff]
        %v562 = vld [vmem:[%s3 + $0x28] sm:$0xff]
        %v563 = vld [vmem:[%s3 + $0x30] sm:$0xff]
        %v564 = vld [vmem:[%s3 + $0x38] sm:$0xff]
        %v565 = vld [vmem:[%s3 + $0x40] sm:$0xff]
        %v566 = vld [vmem:[%s3 + $0x48] sm:$0xff]
        %v567 = vld [vmem:[%s3 + $0x50] sm:$0xff]
        %v568 = vld [vmem:[%s3 + $0x58] sm:$0xff]
        %v569 = vld [vmem:[%s3 + $0x60] sm:$0xff]
        %v570 = vld [vmem:[%s3 + $0x68] sm:$0xff]
        %v571 = vld [vmem:[%s3 + $0x70] sm:$0xff]
        %v572 = vld [vmem:[%s3 + $0x78] sm:$0xff]
        %v573 = vld [vmem:[%s4] sm:$0x1]
        %v575 = vlaneseq
        %v576 = vshrl.u32 %v575, 7
        %v577 = vsub.s32 0, %v576
        %v578 = vrot.slane %v573, %v577
        %580 = vmatprep.subr.mxu0 0.0
        %581 = vmatpush1.msra.mxu0 %v557
        %582 = vmatprep.subr.mxu0 0.0
        %583 = vmatpush1.msra.mxu0 %v558
        %584 = vmatprep.subr.mxu0 0.0
        %585 = vmatpush1.msra.mxu0 %v559
        %586 = vmatprep.subr.mxu0 0.0
        %587 = vmatpush1.msra.mxu0 %v560
        %588 = vmatprep.subr.mxu0 0.0
        %589 = vmatpush1.msra.mxu0 %v561
        %590 = vmatprep.subr.mxu0 0.0
        %591 = vmatpush1.msra.mxu0 %v562
        %592 = vmatprep.subr.mxu0 0.0
        %593 = vmatpush1.msra.mxu0 %v563
        %594 = vmatprep.subr.mxu0 0.0
        %595 = vmatpush1.msra.mxu0 %v564
        %596 = vmatprep.subr.mxu0 0.0
        %597 = vmatpush1.msra.mxu0 %v565
        %598 = vmatprep.subr.mxu0 0.0
        %599 = vmatpush1.msra.mxu0 %v566
        %600 = vmatprep.subr.mxu0 0.0
        %601 = vmatpush1.msra.mxu0 %v567
        %602 = vmatprep.subr.mxu0 0.0
        %603 = vmatpush1.msra.mxu0 %v568
        %604 = vmatprep.subr.mxu0 0.0
        %605 = vmatpush1.msra.mxu0 %v569
        %606 = vmatprep.subr.mxu0 0.0
        %607 = vmatpush1.msra.mxu0 %v570
        %608 = vmatprep.subr.mxu0 0.0
        %609 = vmatpush1.msra.mxu0 %v571
        %610 = vmatprep.subr.mxu0 0.0
        %611 = vmatpush1.msra.mxu0 %v572
        %612 = vmatprep.subr.mxu0 0.0
        %613 = vmatpush1.msra.mxu0 0.0
        %614 = vmatprep.subr.mxu0 0.0
        %615 = vmatpush1.msra.mxu0 0.0
        %616 = vmatprep.subr.mxu0 0.0
        %617 = vmatpush1.msra.mxu0 0.0
        %618 = vmatprep.subr.mxu0 0.0
        %619 = vmatpush1.msra.mxu0 0.0
        %620 = vmatprep.subr.mxu0 0.0
        %621 = vmatpush1.msra.mxu0 0.0
        %622 = vmatprep.subr.mxu0 0.0
        %623 = vmatpush1.msra.mxu0 0.0
        %624 = vmatprep.subr.mxu0 0.0
        %625 = vmatpush1.msra.mxu0 0.0
        %626 = vmatprep.subr.mxu0 0.0
        %627 = vmatpush1.msra.mxu0 0.0
        %628 = vmatprep.subr.mxu0 0.0
        %629 = vmatpush1.msra.mxu0 0.0
        %630 = vmatprep.subr.mxu0 0.0
        %631 = vmatpush1.msra.mxu0 0.0
        %632 = vmatprep.subr.mxu0 0.0
        %633 = vmatpush1.msra.mxu0 0.0
        %634 = vmatprep.subr.mxu0 0.0
        %635 = vmatpush1.msra.mxu0 0.0
        %636 = vmatprep.subr.mxu0 0.0
        %637 = vmatpush1.msra.mxu0 0.0
        %638 = vmatprep.subr.mxu0 0.0
        %639 = vmatpush1.msra.mxu0 0.0
        %640 = vmatprep.subr.mxu0 0.0
        %641 = vmatpush1.msra.mxu0 0.0
        %642 = vmatprep.subr.mxu0 0.0
        %643 = vmatpush1.msra.mxu0 0.0
        %644 = vmatprep.mubr.f32.mxu0 0.0
        %645 = vmatmul.mubr.f32.gmra.mrb[0].mxu0 %v556
        %v646 = vpop.f32.mrb[0].mxu0
        %v647 = vadd.f32 %v578, %v646
        %v648 = vpop.f32.mrb[0].mxu0
        %649 = vdwg.mxu0
        %v650 = vmax.f32 %v647, 0.0
        %v651 = vld [vmem:[%s5] sm:$0xff]
        %v652 = vld [vmem:[%s5 + $0x8] sm:$0xff]
        %v653 = vld [vmem:[%s5 + $0x10] sm:$0xff]
        %v654 = vld [vmem:[%s5 + $0x18] sm:$0xff]
        %v655 = vld [vmem:[%s5 + $0x20] sm:$0xff]
        %v656 = vld [vmem:[%s5 + $0x28] sm:$0xff]
        %v657 = vld [vmem:[%s5 + $0x30] sm:$0xff]
        %v658 = vld [vmem:[%s5 + $0x38] sm:$0xff]
        %v659 = vld [vmem:[%s5 + $0x40] sm:$0xff]
        %v660 = vld [vmem:[%s5 + $0x48] sm:$0xff]
        %v661 = vld [vmem:[%s5 + $0x50] sm:$0xff]
        %v662 = vld [vmem:[%s5 + $0x58] sm:$0xff]
        %v663 = vld [vmem:[%s5 + $0x60] sm:$0xff]
        %v664 = vld [vmem:[%s5 + $0x68] sm:$0xff]
        %v665 = vld [vmem:[%s5 + $0x70] sm:$0xff]
        %v666 = vld [vmem:[%s5 + $0x78] sm:$0xff]
        %v667 = vld [vmem:[%s6] sm:$0x1]
        %v669 = vlaneseq
        %v670 = vshrl.u32 %v669, 7
        %v671 = vsub.s32 0, %v670
        %v672 = vrot.slane %v667, %v671
        %674 = vmatprep.subr.mxu0 0.0
        %675 = vmatpush1.msra.mxu0 %v651
        %676 = vmatprep.subr.mxu0 0.0
        %677 = vmatpush1.msra.mxu0 %v652
        %678 = vmatprep.subr.mxu0 0.0
        %679 = vmatpush1.msra.mxu0 %v653
        %680 = vmatprep.subr.mxu0 0.0
        %681 = vmatpush1.msra.mxu0 %v654
        %682 = vmatprep.subr.mxu0 0.0
        %683 = vmatpush1.msra.mxu0 %v655
        %684 = vmatprep.subr.mxu0 0.0
        %685 = vmatpush1.msra.mxu0 %v656
        %686 = vmatprep.subr.mxu0 0.0
        %687 = vmatpush1.msra.mxu0 %v657
        %688 = vmatprep.subr.mxu0 0.0
        %689 = vmatpush1.msra.mxu0 %v658
        %690 = vmatprep.subr.mxu0 0.0
        %691 = vmatpush1.msra.mxu0 %v659
        %692 = vmatprep.subr.mxu0 0.0
        %693 = vmatpush1.msra.mxu0 %v660
        %694 = vmatprep.subr.mxu0 0.0
        %695 = vmatpush1.msra.mxu0 %v661
        %696 = vmatprep.subr.mxu0 0.0
        %697 = vmatpush1.msra.mxu0 %v662
        %698 = vmatprep.subr.mxu0 0.0
        %699 = vmatpush1.msra.mxu0 %v663
        %700 = vmatprep.subr.mxu0 0.0
        %701 = vmatpush1.msra.mxu0 %v664
        %702 = vmatprep.subr.mxu0 0.0
        %703 = vmatpush1.msra.mxu0 %v665
        %704 = vmatprep.subr.mxu0 0.0
        %705 = vmatpush1.msra.mxu0 %v666
        %706 = vmatprep.subr.mxu0 0.0
        %707 = vmatpush1.msra.mxu0 0.0
        %708 = vmatprep.subr.mxu0 0.0
        %709 = vmatpush1.msra.mxu0 0.0
        %710 = vmatprep.subr.mxu0 0.0
        %711 = vmatpush1.msra.mxu0 0.0
        %712 = vmatprep.subr.mxu0 0.0
        %713 = vmatpush1.msra.mxu0 0.0
        %714 = vmatprep.subr.mxu0 0.0
        %715 = vmatpush1.msra.mxu0 0.0
        %716 = vmatprep.subr.mxu0 0.0
        %717 = vmatpush1.msra.mxu0 0.0
        %718 = vmatprep.subr.mxu0 0.0
        %719 = vmatpush1.msra.mxu0 0.0
        %720 = vmatprep.subr.mxu0 0.0
        %721 = vmatpush1.msra.mxu0 0.0
        %722 = vmatprep.subr.mxu0 0.0
        %723 = vmatpush1.msra.mxu0 0.0
        %724 = vmatprep.subr.mxu0 0.0
        %725 = vmatpush1.msra.mxu0 0.0
        %726 = vmatprep.subr.mxu0 0.0
        %727 = vmatpush1.msra.mxu0 0.0
        %728 = vmatprep.subr.mxu0 0.0
        %729 = vmatpush1.msra.mxu0 0.0
        %730 = vmatprep.subr.mxu0 0.0
        %731 = vmatpush1.msra.mxu0 0.0
        %732 = vmatprep.subr.mxu0 0.0
        %733 = vmatpush1.msra.mxu0 0.0
        %734 = vmatprep.subr.mxu0 0.0
        %735 = vmatpush1.msra.mxu0 0.0
        %736 = vmatprep.subr.mxu0 0.0
        %737 = vmatpush1.msra.mxu0 0.0
        %738 = vmatprep.mubr.f32.mxu0 0.0
        %739 = vmatmul.mubr.f32.gmra.mrb[0].mxu0 %v650
        %v740 = vpop.f32.mrb[0].mxu0
        %v741 = vadd.f32 %v672, %v740
        %v742 = vpop.f32.mrb[0].mxu0
        %743 = vdwg.mxu0
        %744 = vst [vmem:[%s326] sm:$0xff] %v741
      $region56: #{mlp_forward.1} parent=47 // pred_fallthru
        _
      %p745 = scmp.lt.s32.totalorder %s22, 0
      %s746 = scalar_select %p745, %s22, 0
      %s747 = smul.addr %s746, 8
      %s748 = scalar_lea.vmem %s7, %s747
      // Predicated region
      $region57: #{mlp_forward.1} parent=47 // pred_check
        %p749 = pneg %p207
      $region58: #{mlp_forward.1} parent=47 // pred_check_branch
        %751 = sbr.rel (%p749) target = $region60
      $region59: #{mlp_forward.1} parent=47 // pred_region
        _
      $region60: #{mlp_forward.1} parent=47 // pred_fallthru
        _
      // Predicated region
      $region61: #{mlp_forward.1} parent=47 // pred_check
        %p752 = pneg %p207
      $region62: #{mlp_forward.1} parent=47 // pred_check_branch
        %754 = sbr.rel (%p752) target = $region64
      $region63: #{mlp_forward.1} parent=47 // pred_region
        %p755 = scmp.lt.s32.totalorder %s22, 0
        %s756 = scalar_select %p755, %s22, 0
        %s757 = smul.addr %s756, 8
        %s758 = scalar_lea.vmem %s7, %s757
      $region64: #{mlp_forward.1} parent=47 // pred_fallthru
        _
    $region48: #{mlp_forward.1} parent=5 // pred_fallthru
      _
    %p759 = scmp.le.s32.totalorder 2, %s13
    // Predicated region
    $region65: #{mlp_forward.1} parent=5 // pred_check
      %p760 = pneg %p759
    $region66: #{mlp_forward.1} parent=5 // pred_check_branch
      %762 = sbr.rel (%p760) target = $region68
    $region67: #{mlp_forward.1} parent=5 // pred_region
      %s763 = ssub.s32 %s13, 2
    $region68: #{mlp_forward.1} parent=5 // pred_fallthru
      _
  $region6: #{mlp_forward.1} parent=0 // loop_footer
    %s17 = sadd.s32 1, %s13
  $region7: #{mlp_forward.1} parent=0 // loop_footer_branch
    %12 = sbr.rel target = $region3
  $region8: #{mlp_forward.1} parent=0 // loop_exit
    _

</llo_original>
